<compile_context>
chip_gen: v7x
topology: tpu7x:2x2x1
jax: 0.10.0
libtpu: 0.0.40
codegen_flags: <defaults>
</compile_context>

<pallas_src>
import jax
import jax.numpy as jnp
from jax import lax
from jax.experimental import pallas as pl
from jax.experimental.pallas import tpu as pltpu

N_S = 2
HIDDEN = 100
HIDDEN_PAD = 104   # hidden is on the sublane axis: multiple of 8 is enough
LANE = 128


def critic_kernel(sT_ref, w1a_ref, w1b_ref, b1_ref, w2_ref, b2_ref, vT_ref):
    # sT_ref : (N_S, BT)            batch on the lane axis
    # w1a/w1b: (HIDDEN_PAD, 128)    fc1 columns, lane-replicated, zero-padded rows
    # b1     : (HIDDEN_PAD, 128)    lane-replicated
    # w2     : (HIDDEN_PAD, 128)    fc2 weight^T lane-replicated, zero-padded rows
    # b2     : (1, 1) scalar in SMEM
    b2 = b2_ref[0, 0]
    n_chunks = vT_ref.shape[-1] // LANE

    def chunk(c, carry):
        off = pl.multiple_of(c * LANE, LANE)
        # Per-chunk state rows: (1, 128), broadcast along sublanes (cheap).
        s0 = sT_ref[0:1, pl.ds(off, LANE)]
        s1 = sT_ref[1:2, pl.ds(off, LANE)]
        # fc1 on the VPU: two FMAs against lane-dense pre-replicated weights.
        h = w1a_ref[...] * s0 + w1b_ref[...] * s1 + b1_ref[...]   # (104, 128)
        h = jnp.clip(h, 0.0, 6.0)                                 # relu6
        # fc2: multiply + cross-sublane reduce; padded rows of w2 are exactly 0.
        v = jnp.sum(h * w2_ref[...], axis=0, keepdims=True) + b2  # (1, 128)
        vT_ref[:, pl.ds(off, LANE)] = v.astype(vT_ref.dtype)
        return carry

    # Unrolled: short static trip count, gives the LLO scheduler full visibility.
    lax.fori_loop(0, n_chunks, chunk, 0, unroll=True)


def _choose_bt(B, batch_tile):
    """Pick the per-grid-step lane-slab width BT (multiple of 128) and padded B."""
    lane_tiles = pl.cdiv(B, LANE)              # 128-lane tiles needed to cover B
    max_per_step = max(1, batch_tile // LANE)
    if lane_tiles >= 2:
        # Keep >= 2 grid steps so both TensorCores get work on v7x.
        max_per_step = min(max_per_step, pl.cdiv(lane_tiles, 2))
    tiles_per_step = max(1, min(max_per_step, lane_tiles))
    BT = tiles_per_step * LANE
    B_pad = pl.cdiv(lane_tiles, tiles_per_step) * BT
    return BT, B_pad


def critic_forward(s, w1, b1, w2, b2, *, batch_tile=2048):
    """s: (B, N_S) f32; torch-layout params w1 (100,2), b1 (100,), w2 (1,100), b2 (1,).

    Returns v: (B, 1) f32.
    """
    B = s.shape[0]
    BT, B_pad = _choose_bt(B, batch_tile)

    # Wrapper-side layout plumbing (tiny): batch -> lane axis.
    sT = jnp.pad(s, ((0, B_pad - B), (0, 0))).T                  # (N_S, B_pad)

    hp = HIDDEN_PAD - HIDDEN
    w1p = jnp.pad(w1, ((0, hp), (0, 0)))                         # (104, 2), pad rows = 0
    b1p = jnp.pad(b1, (0, hp))                                   # (104,)
    w2p = jnp.pad(w2.reshape(HIDDEN), (0, hp))                   # (104,), pad rows = 0
    # Pre-replicate across the 128-lane axis -> zero lane broadcasts in-kernel.
    w1a_rep = jnp.broadcast_to(w1p[:, 0:1], (HIDDEN_PAD, LANE))
    w1b_rep = jnp.broadcast_to(w1p[:, 1:2], (HIDDEN_PAD, LANE))
    b1_rep = jnp.broadcast_to(b1p[:, None], (HIDDEN_PAD, LANE))
    w2_rep = jnp.broadcast_to(w2p[:, None], (HIDDEN_PAD, LANE))
    b2p = b2.reshape(1, 1)

    vT = pl.pallas_call(
        critic_kernel,
        out_shape=jax.ShapeDtypeStruct((1, B_pad), jnp.float32),
        grid=(B_pad // BT,),
        in_specs=[
            pl.BlockSpec((N_S, BT), lambda i: (0, i)),            # batch slab of s^T
            pl.BlockSpec((HIDDEN_PAD, LANE), lambda i: (0, 0)),   # weights stay resident
            pl.BlockSpec((HIDDEN_PAD, LANE), lambda i: (0, 0)),
            pl.BlockSpec((HIDDEN_PAD, LANE), lambda i: (0, 0)),
            pl.BlockSpec((HIDDEN_PAD, LANE), lambda i: (0, 0)),
            pl.BlockSpec(memory_space=pltpu.MemorySpace.SMEM),    # b2 scalar in SMEM
        ],
        out_specs=pl.BlockSpec((1, BT), lambda i: (0, i)),        # lane-dense output store
        compiler_params=pltpu.CompilerParams(
            dimension_semantics=("parallel",)),                   # 2x TCs on v7x
    )(sT, w1a_rep, w1b_rep, b1_rep, w2_rep, b2p)

    return vT[0, :B].reshape(B, 1)


def init_params(key):
    k1, k2, k3, k4 = jax.random.split(key, 4)
    # Weights ~ N(0, 0.6) as in the torch reference (weight.data.normal_(0, 0.6));
    # biases use torch Linear's default U(-1/sqrt(fan_in), 1/sqrt(fan_in)).
    w1 = 0.6 * jax.random.normal(k1, (HIDDEN, N_S), jnp.float32)   # torch (out, in)
    b1 = jax.random.uniform(k2, (HIDDEN,), jnp.float32,
                            -1.0 / jnp.sqrt(N_S), 1.0 / jnp.sqrt(N_S))
    w2 = 0.6 * jax.random.normal(k3, (1, HIDDEN), jnp.float32)     # torch (out, in)
    b2 = jax.random.uniform(k4, (1,), jnp.float32,
                            -1.0 / jnp.sqrt(HIDDEN), 1.0 / jnp.sqrt(HIDDEN))
    return w1, b1, w2, b2


if __name__ == "__main__":
    key = jax.random.PRNGKey(0)
    pkey, skey = jax.random.split(key)
    w1, b1, w2, b2 = init_params(pkey)

    B = 8  # small batch
    s = jax.random.normal(skey, (B, N_S), jnp.float32)

    v = jax.block_until_ready(critic_forward(s, w1, b1, w2, b2))

    # Pure-JAX reference of the same math (torch layouts: y = x @ W.T + b).
    ref = jnp.clip(s @ w1.T + b1, 0.0, 6.0) @ w2.T + b2
    assert v.shape == (B, 1)
    assert jnp.allclose(v, ref, atol=1e-4, rtol=1e-5)

    # Also exercise a multi-step grid / multi-chunk path.
    B2 = 1000
    s2 = jax.random.normal(jax.random.PRNGKey(1), (B2, N_S), jnp.float32)
    v2 = jax.block_until_ready(critic_forward(s2, w1, b1, w2, b2))
    ref2 = jnp.clip(s2 @ w1.T + b1, 0.0, 6.0) @ w2.T + b2
    assert v2.shape == (B2, 1)
    assert jnp.allclose(v2, ref2, atol=1e-4, rtol=1e-5)

    print("KERNEL_OK")
</pallas_src>

<mosaic_0001>
module attributes {stable_mosaic.version = 11 : i64} {
  func.func @critic_kernel(%arg0: i32, %arg1: memref<2x128xf32, #tpu.memory_space<vmem>>, %arg2: memref<104x128xf32, #tpu.memory_space<vmem>>, %arg3: memref<104x128xf32, #tpu.memory_space<vmem>>, %arg4: memref<104x128xf32, #tpu.memory_space<vmem>>, %arg5: memref<104x128xf32, #tpu.memory_space<vmem>>, %arg6: memref<1x1xf32, #tpu.memory_space<smem>>, %arg7: memref<1x128xf32, #tpu.memory_space<vmem>>) attributes {dimension_semantics = [#tpu.dimension_semantics<parallel>], iteration_bounds = array<i64: 1>, scalar_prefetch = 0 : i64, scratch_operands = 0 : i64, tpu.core_type = #tpu.core_type<tc>, window_params = [{transform_indices = @transform_0, window_bounds = array<i64: 2, 128>}, {pipeline_mode = #tpu.pipeline_mode<synchronous>, transform_indices = @transform_1, window_bounds = array<i64: 104, 128>}, {pipeline_mode = #tpu.pipeline_mode<synchronous>, transform_indices = @transform_2, window_bounds = array<i64: 104, 128>}, {pipeline_mode = #tpu.pipeline_mode<synchronous>, transform_indices = @transform_3, window_bounds = array<i64: 104, 128>}, {pipeline_mode = #tpu.pipeline_mode<synchronous>, transform_indices = @transform_4, window_bounds = array<i64: 104, 128>}, {transform_indices = @transform_5, window_bounds = array<i64: 1, 1>}, {transform_indices = @transform_6, window_bounds = array<i64: 1, 128>}]} {
    %c0 = arith.constant 0 : index
    %c0_0 = arith.constant 0 : index
    %0 = memref.load %arg6[%c0, %c0_0] : memref<1x1xf32, #tpu.memory_space<smem>>
    %c0_i32 = arith.constant 0 : i32
    %c128_i32 = arith.constant 128 : i32
    %1 = arith.muli %c0_i32, %c128_i32 : i32
    %2 = tpu.assume_multiple %1, 128 : i32
    %c0_1 = arith.constant 0 : index
    %3 = arith.index_cast %2 : i32 to index
    %4 = vector.load %arg1[%c0_1, %3] : memref<2x128xf32, #tpu.memory_space<vmem>>, vector<1x128xf32>
    %c1 = arith.constant 1 : index
    %5 = arith.index_cast %2 : i32 to index
    %6 = vector.load %arg1[%c1, %5] : memref<2x128xf32, #tpu.memory_space<vmem>>, vector<1x128xf32>
    %c0_2 = arith.constant 0 : index
    %c0_3 = arith.constant 0 : index
    %7 = vector.load %arg2[%c0_2, %c0_3] : memref<104x128xf32, #tpu.memory_space<vmem>>, vector<104x128xf32>
    %8 = vector.broadcast %4 : vector<1x128xf32> to vector<104x128xf32>
    %9 = arith.mulf %7, %8 : vector<104x128xf32>
    %c0_4 = arith.constant 0 : index
    %c0_5 = arith.constant 0 : index
    %10 = vector.load %arg3[%c0_4, %c0_5] : memref<104x128xf32, #tpu.memory_space<vmem>>, vector<104x128xf32>
    %11 = vector.broadcast %6 : vector<1x128xf32> to vector<104x128xf32>
    %12 = arith.mulf %10, %11 : vector<104x128xf32>
    %13 = arith.addf %9, %12 : vector<104x128xf32>
    %c0_6 = arith.constant 0 : index
    %c0_7 = arith.constant 0 : index
    %14 = vector.load %arg4[%c0_6, %c0_7] : memref<104x128xf32, #tpu.memory_space<vmem>>, vector<104x128xf32>
    %15 = arith.addf %13, %14 : vector<104x128xf32>
    %cst = arith.constant 0.000000e+00 : f32
    %cst_8 = arith.constant 6.000000e+00 : f32
    %16 = vector.broadcast %cst : f32 to vector<104x128xf32>
    %17 = arith.maximumf %16, %15 : vector<104x128xf32>
    %18 = vector.broadcast %cst_8 : f32 to vector<104x128xf32>
    %19 = arith.minimumf %18, %17 : vector<104x128xf32>
    %c0_9 = arith.constant 0 : index
    %c0_10 = arith.constant 0 : index
    %20 = vector.load %arg5[%c0_9, %c0_10] : memref<104x128xf32, #tpu.memory_space<vmem>>, vector<104x128xf32>
    %21 = arith.mulf %19, %20 : vector<104x128xf32>
    %cst_11 = arith.constant dense<0.000000e+00> : vector<128xf32>
    %22 = vector.multi_reduction <add>, %21, %cst_11 [0] : vector<104x128xf32> to vector<128xf32>
    %23 = vector.shape_cast %22 : vector<128xf32> to vector<1x128xf32>
    %24 = vector.broadcast %0 : f32 to vector<1x128xf32>
    %25 = arith.addf %23, %24 : vector<1x128xf32>
    %c0_12 = arith.constant 0 : index
    %26 = arith.index_cast %2 : i32 to index
    %27 = vector.load %arg7[%c0_12, %26] : memref<1x128xf32, #tpu.memory_space<vmem>>, vector<1x128xf32>
    tpu.vector_store %arg7[%c0_12, %26], %25 {strides = array<i32>} : memref<1x128xf32, #tpu.memory_space<vmem>>, vector<1x128xf32>,
    %c1_i32 = arith.constant 1 : i32
    return
  }
  func.func @transform_0(%arg0: i32) -> (i32, i32) {
    %c0_i32 = arith.constant 0 : i32
    %c0_i32_0 = arith.constant 0 : i32
    return %c0_i32, %arg0 : i32, i32
  }
  func.func @transform_1(%arg0: i32) -> (i32, i32) {
    %c0_i32 = arith.constant 0 : i32
    %c0_i32_0 = arith.constant 0 : i32
    %c0_i32_1 = arith.constant 0 : i32
    return %c0_i32, %c0_i32_0 : i32, i32
  }
  func.func @transform_2(%arg0: i32) -> (i32, i32) {
    %c0_i32 = arith.constant 0 : i32
    %c0_i32_0 = arith.constant 0 : i32
    %c0_i32_1 = arith.constant 0 : i32
    return %c0_i32, %c0_i32_0 : i32, i32
  }
  func.func @transform_3(%arg0: i32) -> (i32, i32) {
    %c0_i32 = arith.constant 0 : i32
    %c0_i32_0 = arith.constant 0 : i32
    %c0_i32_1 = arith.constant 0 : i32
    return %c0_i32, %c0_i32_0 : i32, i32
  }
  func.func @transform_4(%arg0: i32) -> (i32, i32) {
    %c0_i32 = arith.constant 0 : i32
    %c0_i32_0 = arith.constant 0 : i32
    %c0_i32_1 = arith.constant 0 : i32
    return %c0_i32, %c0_i32_0 : i32, i32
  }
  func.func @transform_5(%arg0: i32) -> (i32, i32) {
    %c0_i32 = arith.constant 0 : i32
    %c0_i32_0 = arith.constant 0 : i32
    %c0_i32_1 = arith.constant 0 : i32
    return %c0_i32, %c0_i32_0 : i32, i32
  }
  func.func @transform_6(%arg0: i32) -> (i32, i32) {
    %c0_i32 = arith.constant 0 : i32
    %c0_i32_0 = arith.constant 0 : i32
    return %c0_i32, %arg0 : i32, i32
  }
}

</mosaic_0001>

<llo_original>
// kernel: tpu_custom_call.1
$region0: #{tpu_custom_call.1}
  #allocation0 [shape = 'u32[]', space=smem, size = 0x4, offset = 0x4, fixed_abs, tag = 'smem constant byte address 0x4 - core index']
  #allocation1 [shape = 'u32[144,128]{1,0:T(1,128)}', space=vmem, size = 0x12000, scoped, tag = 'internal scratch']
  #allocation2 [shape = 'f32[1,1]{1,0:T(1,128)S(6)}', space=smem, size = 0x200, scoped, tag = 'scoped memory for tpu_custom_call.1']
  %s0 = inlined_call_operand.vmem [shape: f32[2,128], index: 0, kind: input, shape index: {}]
  %s1 = inlined_call_operand.hbm [shape: f32[104,128], index: 1, kind: input, shape index: {}]
  %s2 = inlined_call_operand.hbm [shape: f32[104,128], index: 2, kind: input, shape index: {}]
  %s3 = inlined_call_operand.hbm [shape: f32[104,128], index: 3, kind: input, shape index: {}]
  %s4 = inlined_call_operand.hbm [shape: f32[104,128], index: 4, kind: input, shape index: {}]
  %s5 = inlined_call_operand.<no memory space> [shape: f32[1,1], index: 5, kind: input, shape index: {}]
  %s6 = inlined_call_operand.hbm [shape: f32[1,128], index: 6, kind: output, shape index: {}]
  %s7 = sld [smem:[#allocation0]]
  $region50: #{tpu_custom_call.1} parent=0
    _
  %s9 = ssub.s32 1, %s7
  %s10 = scalar_select 0, %s9, %s7
  %11 = sst [smem:[#allocation2]] %s5
  $region1: #{tpu_custom_call.1} parent=0
    #allocation3 [shape = 'u8[53248]{0}', space=vmem, size = 0xd000, scoped, tag = 'input window, operand 1, single buffered']
    #allocation4 [shape = 's32[1]{0}', space=sflag, size = 0x4, scoped, tag = 'scoped memory for tpu_custom_call.1']
    #allocation5 [shape = 's32[1]{0}', space=sflag, size = 0x4, scoped, tag = 'scoped memory for tpu_custom_call.1']
    #allocation6 [shape = 'u8[53248]{0}', space=vmem, size = 0xd000, scoped, tag = 'input window, operand 2, single buffered']
    #allocation7 [shape = 's32[1]{0}', space=sflag, size = 0x4, scoped, tag = 'scoped memory for tpu_custom_call.1']
    #allocation8 [shape = 'u8[53248]{0}', space=vmem, size = 0xd000, scoped, tag = 'input window, operand 3, single buffered']
    #allocation9 [shape = 'u8[53248]{0}', space=vmem, size = 0xd000, scoped, tag = 'input window, operand 4, single buffered']
    #allocation10 [shape = 's32[1]{0}', space=sflag, size = 0x4, scoped, tag = 'scoped memory for tpu_custom_call.1']
    #allocation11 [shape = 'u8[512]{0}', space=vmem, size = 0x400, scoped, tag = 'output window, operand 0, single buffered']
    %12 = vsyncpa [#allocation4], 0
    %13 = vsyncpa [#allocation7], 0
    %14 = vsyncpa [#allocation10], 0
    %15 = vsyncpa [#allocation5], 0
    // Predicated region
    $region2: #{tpu_custom_call.1} parent=1 // pred_check
      _
    $region3: #{tpu_custom_call.1} parent=1 // pred_check_branch
      %17 = sbr.rel (0) target = $region5
    $region4: #{tpu_custom_call.1} parent=1 // pred_region
      _
    $region5: #{tpu_custom_call.1} parent=1 // pred_fallthru
      _
    // Predicated region
    $region6: #{tpu_custom_call.1} parent=1 // pred_check
      _
    $region7: #{tpu_custom_call.1} parent=1 // pred_check_branch
      %19 = sbr.rel (0) target = $region9
    $region8: #{tpu_custom_call.1} parent=1 // pred_region
      %s21 = ssub.s32 1664, 1664
      %22 = vsyncadd [#allocation4], %s21
      %s23 = sshll.u32 [#allocation3], 4
      %s24 = int_to_ptr.vmem [resolvable:$true] %s23
      %29 = dma.hbm_to_vmem [thread:$0]  %s1, 1664, %s24, [#allocation4], 128, 128, 8
    $region9: #{tpu_custom_call.1} parent=1 // pred_fallthru
      _
    // Predicated region
    $region10: #{tpu_custom_call.1} parent=1 // pred_check
      _
    $region11: #{tpu_custom_call.1} parent=1 // pred_check_branch
      %31 = sbr.rel (0) target = $region13
    $region12: #{tpu_custom_call.1} parent=1 // pred_region
      %s33 = ssub.s32 1664, 1664
      %34 = vsyncadd [#allocation7], %s33
      %s35 = sshll.u32 [#allocation6], 4
      %s36 = int_to_ptr.vmem [resolvable:$true] %s35
      %41 = dma.hbm_to_vmem [thread:$0]  %s2, 1664, %s36, [#allocation7], 128, 128, 8
    $region13: #{tpu_custom_call.1} parent=1 // pred_fallthru
      _
    // Predicated region
    $region14: #{tpu_custom_call.1} parent=1 // pred_check
      _
    $region15: #{tpu_custom_call.1} parent=1 // pred_check_branch
      %43 = sbr.rel (0) target = $region17
    $region16: #{tpu_custom_call.1} parent=1 // pred_region
      %s45 = ssub.s32 1664, 1664
      %46 = vsyncadd [#allocation7], %s45
      %s47 = sshll.u32 [#allocation8], 4
      %s48 = int_to_ptr.vmem [resolvable:$true] %s47
      %53 = dma.hbm_to_vmem [thread:$0]  %s3, 1664, %s48, [#allocation7], 128, 128, 8
    $region17: #{tpu_custom_call.1} parent=1 // pred_fallthru
      _
    // Predicated region
    $region18: #{tpu_custom_call.1} parent=1 // pred_check
      _
    $region19: #{tpu_custom_call.1} parent=1 // pred_check_branch
      %55 = sbr.rel (0) target = $region21
    $region20: #{tpu_custom_call.1} parent=1 // pred_region
      %s57 = ssub.s32 1664, 1664
      %58 = vsyncadd [#allocation10], %s57
      %s59 = sshll.u32 [#allocation9], 4
      %s60 = int_to_ptr.vmem [resolvable:$true] %s59
      %65 = dma.hbm_to_vmem [thread:$0]  %s4, 1664, %s60, [#allocation10], 128, 128, 8
    $region21: #{tpu_custom_call.1} parent=1 // pred_fallthru
      _
    // Predicated region
    $region22: #{tpu_custom_call.1} parent=1 // pred_check
      _
    $region23: #{tpu_custom_call.1} parent=1 // pred_check_branch
      %67 = sbr.rel (0) target = $region25
    $region24: #{tpu_custom_call.1} parent=1 // pred_region
      _
    $region25: #{tpu_custom_call.1} parent=1 // pred_fallthru
      _
    // Predicated region
    $region26: #{tpu_custom_call.1} parent=1 // pred_check
      _
    $region27: #{tpu_custom_call.1} parent=1 // pred_check_branch
      %69 = sbr.rel (0) target = $region29
    $region28: #{tpu_custom_call.1} parent=1 // pred_region
      %70 = dma.done [#allocation4], 1664
    $region29: #{tpu_custom_call.1} parent=1 // pred_fallthru
      _
    // Predicated region
    $region30: #{tpu_custom_call.1} parent=1 // pred_check
      _
    $region31: #{tpu_custom_call.1} parent=1 // pred_check_branch
      %72 = sbr.rel (0) target = $region33
    $region32: #{tpu_custom_call.1} parent=1 // pred_region
      %73 = dma.done [#allocation7], 1664
    $region33: #{tpu_custom_call.1} parent=1 // pred_fallthru
      _
    // Predicated region
    $region34: #{tpu_custom_call.1} parent=1 // pred_check
      _
    $region35: #{tpu_custom_call.1} parent=1 // pred_check_branch
      %75 = sbr.rel (0) target = $region37
    $region36: #{tpu_custom_call.1} parent=1 // pred_region
      %76 = dma.done [#allocation7], 1664
    $region37: #{tpu_custom_call.1} parent=1 // pred_fallthru
      _
    // Predicated region
    $region38: #{tpu_custom_call.1} parent=1 // pred_check
      _
    $region39: #{tpu_custom_call.1} parent=1 // pred_check_branch
      %78 = sbr.rel (0) target = $region41
    $region40: #{tpu_custom_call.1} parent=1 // pred_region
      %79 = dma.done [#allocation10], 1664
    $region41: #{tpu_custom_call.1} parent=1 // pred_fallthru
      _
    %s80 = sld [smem:[#allocation2]]
    %v81 = vld [vmem:[%s0] sm:$0x1]
    %v82 = vld [vmem:[%s0 + $0x1] sm:$0x1]
    %v83 = vld [vmem:[#allocation3] sm:$0xff]
    %v84 = vld [vmem:[#allocation3 + $0x8] sm:$0xff]
    %v85 = vld [vmem:[#allocation3 + $0x10] sm:$0xff]
    %v86 = vld [vmem:[#allocation3 + $0x18] sm:$0xff]
    %v87 = vld [vmem:[#allocation3 + $0x20] sm:$0xff]
    %v88 = vld [vmem:[#allocation3 + $0x28] sm:$0xff]
    %v89 = vld [vmem:[#allocation3 + $0x30] sm:$0xff]
    %v90 = vld [vmem:[#allocation3 + $0x38] sm:$0xff]
    %v91 = vld [vmem:[#allocation3 + $0x40] sm:$0xff]
    %v92 = vld [vmem:[#allocation3 + $0x48] sm:$0xff]
    %v93 = vld [vmem:[#allocation3 + $0x50] sm:$0xff]
    %v94 = vld [vmem:[#allocation3 + $0x58] sm:$0xff]
    %v95 = vld [vmem:[#allocation3 + $0x60] sm:$0xff]
    %v96 = vlaneseq
    %v97 = vshrl.u32 %v96, 7
    %v98 = vsub.s32 0, %v97
    %v99 = vrot.slane %v81, %v98
    %v100 = vmul.f32 %v83, %v99
    %v101 = vmul.f32 %v84, %v99
    %v102 = vmul.f32 %v85, %v99
    %v103 = vmul.f32 %v86, %v99
    %v104 = vmul.f32 %v87, %v99
    %v105 = vmul.f32 %v88, %v99
    %v106 = vmul.f32 %v89, %v99
    %v107 = vmul.f32 %v90, %v99
    %v108 = vmul.f32 %v91, %v99
    %v109 = vmul.f32 %v92, %v99
    %v110 = vmul.f32 %v93, %v99
    %v111 = vmul.f32 %v94, %v99
    %v112 = vmul.f32 %v95, %v99
    %v113 = vld [vmem:[#allocation6] sm:$0xff]
    %v114 = vld [vmem:[#allocation6 + $0x8] sm:$0xff]
    %v115 = vld [vmem:[#allocation6 + $0x10] sm:$0xff]
    %v116 = vld [vmem:[#allocation6 + $0x18] sm:$0xff]
    %v117 = vld [vmem:[#allocation6 + $0x20] sm:$0xff]
    %v118 = vld [vmem:[#allocation6 + $0x28] sm:$0xff]
    %v119 = vld [vmem:[#allocation6 + $0x30] sm:$0xff]
    %v120 = vld [vmem:[#allocation6 + $0x38] sm:$0xff]
    %v121 = vld [vmem:[#allocation6 + $0x40] sm:$0xff]
    %v122 = vld [vmem:[#allocation6 + $0x48] sm:$0xff]
    %v123 = vld [vmem:[#allocation6 + $0x50] sm:$0xff]
    %v124 = vld [vmem:[#allocation6 + $0x58] sm:$0xff]
    %v125 = vld [vmem:[#allocation6 + $0x60] sm:$0xff]
    %v126 = vlaneseq
    %v127 = vshrl.u32 %v126, 7
    %v128 = vsub.s32 0, %v127
    %v129 = vrot.slane %v82, %v128
    %v130 = vmul.f32 %v113, %v129
    %v131 = vmul.f32 %v114, %v129
    %v132 = vmul.f32 %v115, %v129
    %v133 = vmul.f32 %v116, %v129
    %v134 = vmul.f32 %v117, %v129
    %v135 = vmul.f32 %v118, %v129
    %v136 = vmul.f32 %v119, %v129
    %v137 = vmul.f32 %v120, %v129
    %v138 = vmul.f32 %v121, %v129
    %v139 = vmul.f32 %v122, %v129
    %v140 = vmul.f32 %v123, %v129
    %v141 = vmul.f32 %v124, %v129
    %v142 = vmul.f32 %v125, %v129
    %v143 = vadd.f32 %v100, %v130
    %v144 = vadd.f32 %v101, %v131
    %v145 = vadd.f32 %v102, %v132
    %v146 = vadd.f32 %v103, %v133
    %v147 = vadd.f32 %v104, %v134
    %v148 = vadd.f32 %v105, %v135
    %v149 = vadd.f32 %v106, %v136
    %v150 = vadd.f32 %v107, %v137
    %v151 = vadd.f32 %v108, %v138
    %v152 = vadd.f32 %v109, %v139
    %v153 = vadd.f32 %v110, %v140
    %v154 = vadd.f32 %v111, %v141
    %v155 = vadd.f32 %v112, %v142
    %v156 = vld [vmem:[#allocation8] sm:$0xff]
    %v157 = vld [vmem:[#allocation8 + $0x8] sm:$0xff]
    %v158 = vld [vmem:[#allocation8 + $0x10] sm:$0xff]
    %v159 = vld [vmem:[#allocation8 + $0x18] sm:$0xff]
    %v160 = vld [vmem:[#allocation8 + $0x20] sm:$0xff]
    %v161 = vld [vmem:[#allocation8 + $0x28] sm:$0xff]
    %v162 = vld [vmem:[#allocation8 + $0x30] sm:$0xff]
    %v163 = vld [vmem:[#allocation8 + $0x38] sm:$0xff]
    %v164 = vld [vmem:[#allocation8 + $0x40] sm:$0xff]
    %v165 = vld [vmem:[#allocation8 + $0x48] sm:$0xff]
    %v166 = vld [vmem:[#allocation8 + $0x50] sm:$0xff]
    %v167 = vld [vmem:[#allocation8 + $0x58] sm:$0xff]
    %v168 = vld [vmem:[#allocation8 + $0x60] sm:$0xff]
    %v169 = vadd.f32 %v143, %v156
    %v170 = vadd.f32 %v144, %v157
    %v171 = vadd.f32 %v145, %v158
    %v172 = vadd.f32 %v146, %v159
    %v173 = vadd.f32 %v147, %v160
    %v174 = vadd.f32 %v148, %v161
    %v175 = vadd.f32 %v149, %v162
    %v176 = vadd.f32 %v150, %v163
    %v177 = vadd.f32 %v151, %v164
    %v178 = vadd.f32 %v152, %v165
    %v179 = vadd.f32 %v153, %v166
    %v180 = vadd.f32 %v154, %v167
    %v181 = vadd.f32 %v155, %v168
    %v182 = vmax.f32 %v169, 0.0
    %v183 = vmax.f32 %v170, 0.0
    %v184 = vmax.f32 %v171, 0.0
    %v185 = vmax.f32 %v172, 0.0
    %v186 = vmax.f32 %v173, 0.0
    %v187 = vmax.f32 %v174, 0.0
    %v188 = vmax.f32 %v175, 0.0
    %v189 = vmax.f32 %v176, 0.0
    %v190 = vmax.f32 %v177, 0.0
    %v191 = vmax.f32 %v178, 0.0
    %v192 = vmax.f32 %v179, 0.0
    %v193 = vmax.f32 %v180, 0.0
    %v194 = vmax.f32 %v181, 0.0
    %v195 = vmin.f32 %v182, 6.0
    %v196 = vmin.f32 %v183, 6.0
    %v197 = vmin.f32 %v184, 6.0
    %v198 = vmin.f32 %v185, 6.0
    %v199 = vmin.f32 %v186, 6.0
    %v200 = vmin.f32 %v187, 6.0
    %v201 = vmin.f32 %v188, 6.0
    %v202 = vmin.f32 %v189, 6.0
    %v203 = vmin.f32 %v190, 6.0
    %v204 = vmin.f32 %v191, 6.0
    %v205 = vmin.f32 %v192, 6.0
    %v206 = vmin.f32 %v193, 6.0
    %v207 = vmin.f32 %v194, 6.0
    %v208 = vld [vmem:[#allocation9] sm:$0xff]
    %v209 = vld [vmem:[#allocation9 + $0x8] sm:$0xff]
    %v210 = vld [vmem:[#allocation9 + $0x10] sm:$0xff]
    %v211 = vld [vmem:[#allocation9 + $0x18] sm:$0xff]
    %v212 = vld [vmem:[#allocation9 + $0x20] sm:$0xff]
    %v213 = vld [vmem:[#allocation9 + $0x28] sm:$0xff]
    %v214 = vld [vmem:[#allocation9 + $0x30] sm:$0xff]
    %v215 = vld [vmem:[#allocation9 + $0x38] sm:$0xff]
    %v216 = vld [vmem:[#allocation9 + $0x40] sm:$0xff]
    %v217 = vld [vmem:[#allocation9 + $0x48] sm:$0xff]
    %v218 = vld [vmem:[#allocation9 + $0x50] sm:$0xff]
    %v219 = vld [vmem:[#allocation9 + $0x58] sm:$0xff]
    %v220 = vld [vmem:[#allocation9 + $0x60] sm:$0xff]
    %v221 = vmul.f32 %v195, %v208
    %v222 = vmul.f32 %v196, %v209
    %v223 = vmul.f32 %v197, %v210
    %v224 = vmul.f32 %v198, %v211
    %v225 = vmul.f32 %v199, %v212
    %v226 = vmul.f32 %v200, %v213
    %v227 = vmul.f32 %v201, %v214
    %v228 = vmul.f32 %v202, %v215
    %v229 = vmul.f32 %v203, %v216
    %v230 = vmul.f32 %v204, %v217
    %v231 = vmul.f32 %v205, %v218
    %v232 = vmul.f32 %v206, %v219
    %v233 = vmul.f32 %v207, %v220
    %v234 = vadd.f32 %v221, %v222
    %v235 = vadd.f32 %v234, %v223
    %v236 = vadd.f32 %v235, %v224
    %v237 = vadd.f32 %v236, %v225
    %v238 = vadd.f32 %v237, %v226
    %v239 = vadd.f32 %v238, %v227
    %v240 = vadd.f32 %v239, %v228
    %v241 = vadd.f32 %v240, %v229
    %v242 = vadd.f32 %v241, %v230
    %v243 = vadd.f32 %v242, %v231
    %v244 = vadd.f32 %v243, %v232
    %v245 = vadd.f32 %v244, %v233
    %v246 = vrot.slane %v245, 4
    %v247 = vadd.f32 %v245, %v246
    %v248 = vrot.slane %v247, 2
    %v249 = vadd.f32 %v247, %v248
    %v250 = vrot.slane %v249, 1
    %v251 = vadd.f32 %v249, %v250
    %v252 = vstv %s80
    %v253 = vadd.f32 %v251, %v252
    %254 = vst [vmem:[#allocation11] sm:$0x1] %v253
    // Predicated region
    $region42: #{tpu_custom_call.1} parent=1 // pred_check
      _
    $region43: #{tpu_custom_call.1} parent=1 // pred_check_branch
      %256 = sbr.rel (0) target = $region45
    $region44: #{tpu_custom_call.1} parent=1 // pred_region
      %s258 = ssub.s32 16, 16
      %259 = vsyncadd [#allocation5], %s258
      %s261 = sshll.u32 [#allocation11], 4
      %s262 = int_to_ptr.vmem [resolvable:$true] %s261
      %264 = dma.vmem_to_hbm [thread:$0]  %s262, 16, %s6, [#allocation5]
    $region45: #{tpu_custom_call.1} parent=1 // pred_fallthru
      _
    // Predicated region
    $region46: #{tpu_custom_call.1} parent=1 // pred_check
      _
    $region47: #{tpu_custom_call.1} parent=1 // pred_check_branch
      %266 = sbr.rel (0) target = $region49
    $region48: #{tpu_custom_call.1} parent=1 // pred_region
      %267 = dma.done [#allocation5], 16
    $region49: #{tpu_custom_call.1} parent=1 // pred_fallthru
      _
    %268 = vsyncpa [#allocation4], 1
    %269 = vsyncpa [#allocation7], 1
    %270 = vsyncpa [#allocation10], 1
    %271 = vsyncpa [#allocation5], 1

</llo_original>
